<compile_context>
chip_gen: v5e
topology: v5e:2x2
jax: 0.10.0
libtpu: 0.0.40
codegen_flags: <defaults>
</compile_context>

<pallas_src>
import math

import jax
import jax.numpy as jnp
from jax.experimental import pallas as pl
from jax.experimental.pallas import tpu as pltpu

ROW_INPUT_NODE = 215   # rowInputNode
ROW_HIDE_NODE = 120    # rowHideNode
ROW_MID_NODE = 60
ROW_OUT_NODE = 70      # rowOutNode

_LANE = 128            # padded feature width for hidden / output


def _round_up(n, m):
    return ((n + m - 1) // m) * m


def _choose_tile(batch, tile_b):
    """Clamp/round the batch tile: multiple of 256 for big tiles, 16 otherwise."""
    tile_b = max(16, int(tile_b))
    tile_b = min(tile_b, _round_up(batch, 16))     # never bigger than the batch
    mult = 256 if tile_b >= 256 else 16
    return _round_up(tile_b, mult)


def _rownet_kernel(x_ref, w1_ref, b1_ref, w2_ref, b2_ref, out_ref):
    """One batch tile: (TB,215)f32 -> matmul/relu -> matmul/relu -> (TB,128)bf16."""
    # f32 -> bf16 cast done in-kernel (VPU slack), avoiding a wrapper HBM pass.
    x = x_ref[...].astype(jnp.bfloat16)                               # (TB, 215)

    # InputLayer (padded to 128 outputs): (TB,215)@(215,128) + (1,128), ReLU
    h = jnp.dot(x, w1_ref[...], preferred_element_type=jnp.float32)
    h = jnp.maximum(h + b1_ref[...], 0.0)                             # (TB, 128) f32

    # fused hid1Layer+hideLayer (padded): (TB,128)@(128,128) + (1,128), ReLU
    o = jnp.dot(h.astype(jnp.bfloat16), w2_ref[...],
                preferred_element_type=jnp.float32)
    out_ref[...] = jnp.maximum(o + b2_ref[...], 0.0).astype(out_ref.dtype)


def fuse_and_pad_params(params):
    """Fold hid1Layer into hideLayer and zero-pad feature dims to 128 lanes."""
    w2 = params["w_h1"] @ params["w_hide"]                        # (120, 70)
    b2 = params["b_h1"] @ params["w_hide"] + params["b_hide"]     # (1, 70)

    w1p = jnp.zeros((ROW_INPUT_NODE, _LANE), jnp.float32)
    w1p = w1p.at[:, :ROW_HIDE_NODE].set(params["w_in"])
    b1p = jnp.zeros((1, _LANE), jnp.float32).at[:, :ROW_HIDE_NODE].set(params["b_in"])

    w2p = jnp.zeros((_LANE, _LANE), jnp.float32)
    w2p = w2p.at[:ROW_HIDE_NODE, :ROW_OUT_NODE].set(w2)
    b2p = jnp.zeros((1, _LANE), jnp.float32).at[:, :ROW_OUT_NODE].set(b2)

    # weights in bf16 (MXU-native), biases kept in f32 (added to f32 accumulators)
    return dict(w1=w1p.astype(jnp.bfloat16), b1=b1p,
                w2=w2p.astype(jnp.bfloat16), b2=b2p)


def rownet_forward(x, fused, *, tile_b=4096, slice_output=True):
    """x: (B, 215) float32.  fused: output of fuse_and_pad_params().

    Returns (B, 70) bf16 if slice_output else the lane-padded (B, 128) bf16
    buffer (lets the consumer fuse the column slice).
    """
    B = x.shape[0]
    tile_b = _choose_tile(B, tile_b)
    grid = (pl.cdiv(B, tile_b),)                   # partial tail block is masked

    # --- cost estimate (f32 x read, bf16 weights, f32 biases, bf16 out) ---
    flops = 2 * B * (ROW_INPUT_NODE * _LANE + _LANE * _LANE)
    bytes_accessed = (B * ROW_INPUT_NODE * 4                          # x (f32)
                      + (ROW_INPUT_NODE * _LANE + _LANE * _LANE) * 2  # weights (bf16)
                      + 2 * _LANE * 4                                 # biases (f32)
                      + B * _LANE * 2)                                # out (bf16)

    # --- VMEM budget: double-buffered x (f32, 215->256 lanes) + bf16 out ---
    x_tile_bytes = tile_b * 256 * 4
    out_tile_bytes = tile_b * _LANE * 2
    w_bytes = (256 * _LANE + _LANE * _LANE) * 2 + 4 * _LANE * 4
    vmem_need = 2 * (x_tile_bytes + out_tile_bytes) + w_bytes
    vmem_limit = int(min(48 << 20, max(16 << 20, 2 * vmem_need)))

    out_padded = pl.pallas_call(
        _rownet_kernel,
        out_shape=jax.ShapeDtypeStruct((B, _LANE), jnp.bfloat16),
        grid=grid,
        in_specs=[
            pl.BlockSpec((tile_b, ROW_INPUT_NODE), lambda i: (i, 0)),   # x tile
            pl.BlockSpec((ROW_INPUT_NODE, _LANE), lambda i: (0, 0)),    # w1 (resident)
            pl.BlockSpec((1, _LANE), lambda i: (0, 0)),                 # b1 (resident)
            pl.BlockSpec((_LANE, _LANE), lambda i: (0, 0)),             # w2 (resident)
            pl.BlockSpec((1, _LANE), lambda i: (0, 0)),                 # b2 (resident)
        ],
        out_specs=pl.BlockSpec((tile_b, _LANE), lambda i: (i, 0)),
        compiler_params=pltpu.CompilerParams(
            dimension_semantics=("parallel",),       # megacore shard on v7x
            vmem_limit_bytes=vmem_limit),
        cost_estimate=pl.CostEstimate(
            flops=flops, transcendentals=0, bytes_accessed=bytes_accessed),
    )(x, fused["w1"], fused["b1"], fused["w2"], fused["b2"])

    if slice_output:
        return out_padded[:, :ROW_OUT_NODE]          # consumer may fuse this
    return out_padded


def init_params(key):
    """Deterministic init mimicking nn.Linear's U(-1/sqrt(fan_in), 1/sqrt(fan_in))."""
    def linear(key, fan_in, fan_out):
        kw, kb = jax.random.split(key)
        bound = 1.0 / math.sqrt(fan_in)
        # stored transposed: (in_features, out_features)
        w = jax.random.uniform(kw, (fan_in, fan_out), jnp.float32, -bound, bound)
        b = jax.random.uniform(kb, (1, fan_out), jnp.float32, -bound, bound)
        return w, b

    k1, k2, k3 = jax.random.split(key, 3)
    w_in, b_in = linear(k1, ROW_INPUT_NODE, ROW_HIDE_NODE)   # (215,120),(1,120)
    w_h1, b_h1 = linear(k2, ROW_HIDE_NODE, ROW_MID_NODE)     # (120,60), (1,60)
    w_hide, b_hide = linear(k3, ROW_MID_NODE, ROW_OUT_NODE)  # (60,70),  (1,70)
    return dict(w_in=w_in, b_in=b_in, w_h1=w_h1, b_h1=b_h1,
                w_hide=w_hide, b_hide=b_hide)


def rownet_reference(x, p):
    """Pure f32, unfused 3-layer reference (same graph the kernel implements)."""
    h = jnp.maximum(x @ p["w_in"] + p["b_in"], 0.0)
    h = h @ p["w_h1"] + p["b_h1"]
    return jnp.maximum(h @ p["w_hide"] + p["b_hide"], 0.0)


if __name__ == "__main__":
    key = jax.random.PRNGKey(0)
    kx, kp = jax.random.split(key)

    B = 200  # deliberately NOT a multiple of the tile: exercises the masked tail block
    x = jax.random.normal(kx, (B, ROW_INPUT_NODE), jnp.float32)
    params = init_params(kp)
    fused = fuse_and_pad_params(params)

    # small tile so the test exercises a multi-step (grid=4) pipelined run
    out = rownet_forward(x, fused, tile_b=64)
    out = jax.block_until_ready(out)

    ref = rownet_reference(x, params)
    assert out.shape == (B, ROW_OUT_NODE), out.shape
    assert out.dtype == jnp.bfloat16, out.dtype
    out_f32 = out.astype(jnp.float32)
    max_err = float(jnp.max(jnp.abs(out_f32 - ref)))
    # tolerance accounts for bf16 activations/weights/output (f32 accumulation)
    # + FP reassociation from the offline layer fusion
    assert jnp.allclose(out_f32, ref, atol=5e-2, rtol=5e-2), \
        f"mismatch, max err={max_err}"

    print("KERNEL_OK")
</pallas_src>

<mosaic_0001>
module attributes {stable_mosaic.version = 11 : i64} {
  func.func @_rownet_kernel(%arg0: i32, %arg1: memref<64x215xf32, #tpu.memory_space<vmem>>, %arg2: memref<215x128xbf16, #tpu.memory_space<vmem>>, %arg3: memref<1x128xf32, #tpu.memory_space<vmem>>, %arg4: memref<128x128xbf16, #tpu.memory_space<vmem>>, %arg5: memref<1x128xf32, #tpu.memory_space<vmem>>, %arg6: memref<64x128xbf16, #tpu.memory_space<vmem>>) attributes {dimension_semantics = [#tpu.dimension_semantics<parallel>], iteration_bounds = array<i64: 4>, scalar_prefetch = 0 : i64, scratch_operands = 0 : i64, tpu.core_type = #tpu.core_type<tc>, window_params = [{transform_indices = @transform_0, window_bounds = array<i64: 64, 215>}, {pipeline_mode = #tpu.pipeline_mode<synchronous>, transform_indices = @transform_1, window_bounds = array<i64: 215, 128>}, {pipeline_mode = #tpu.pipeline_mode<synchronous>, transform_indices = @transform_2, window_bounds = array<i64: 1, 128>}, {pipeline_mode = #tpu.pipeline_mode<synchronous>, transform_indices = @transform_3, window_bounds = array<i64: 128, 128>}, {pipeline_mode = #tpu.pipeline_mode<synchronous>, transform_indices = @transform_4, window_bounds = array<i64: 1, 128>}, {transform_indices = @transform_5, window_bounds = array<i64: 64, 128>}]} {
    %c0 = arith.constant 0 : index
    %c0_0 = arith.constant 0 : index
    %0 = vector.load %arg1[%c0, %c0_0] : memref<64x215xf32, #tpu.memory_space<vmem>>, vector<64x215xf32>
    %1 = arith.truncf %0 : vector<64x215xf32> to vector<64x215xbf16>
    %c0_1 = arith.constant 0 : index
    %c0_2 = arith.constant 0 : index
    %2 = vector.load %arg2[%c0_1, %c0_2] : memref<215x128xbf16, #tpu.memory_space<vmem>>, vector<215x128xbf16>
    %cst = arith.constant dense<0.000000e+00> : vector<64x128xf32>
    %3 = tpu.matmul %1, %2, %cst {dimension_numbers = #tpu.dot_dimension_numbers<[1], [0], [0], [1], [0, 0, 1, 1], [], []>} : vector<64x215xbf16>, vector<215x128xbf16>, vector<64x128xf32> -> vector<64x128xf32>
    %c0_3 = arith.constant 0 : index
    %c0_4 = arith.constant 0 : index
    %4 = vector.load %arg3[%c0_3, %c0_4] : memref<1x128xf32, #tpu.memory_space<vmem>>, vector<1x128xf32>
    %5 = vector.broadcast %4 : vector<1x128xf32> to vector<64x128xf32>
    %6 = arith.addf %3, %5 : vector<64x128xf32>
    %cst_5 = arith.constant 0.000000e+00 : f32
    %7 = vector.broadcast %cst_5 : f32 to vector<64x128xf32>
    %8 = arith.maximumf %6, %7 : vector<64x128xf32>
    %9 = arith.truncf %8 : vector<64x128xf32> to vector<64x128xbf16>
    %c0_6 = arith.constant 0 : index
    %c0_7 = arith.constant 0 : index
    %10 = vector.load %arg4[%c0_6, %c0_7] : memref<128x128xbf16, #tpu.memory_space<vmem>>, vector<128x128xbf16>
    %cst_8 = arith.constant dense<0.000000e+00> : vector<64x128xf32>
    %11 = tpu.matmul %9, %10, %cst_8 {dimension_numbers = #tpu.dot_dimension_numbers<[1], [0], [0], [1], [0, 0, 1, 1], [], []>} : vector<64x128xbf16>, vector<128x128xbf16>, vector<64x128xf32> -> vector<64x128xf32>
    %c0_9 = arith.constant 0 : index
    %c0_10 = arith.constant 0 : index
    %12 = vector.load %arg5[%c0_9, %c0_10] : memref<1x128xf32, #tpu.memory_space<vmem>>, vector<1x128xf32>
    %13 = vector.broadcast %12 : vector<1x128xf32> to vector<64x128xf32>
    %14 = arith.addf %11, %13 : vector<64x128xf32>
    %cst_11 = arith.constant 0.000000e+00 : f32
    %15 = vector.broadcast %cst_11 : f32 to vector<64x128xf32>
    %16 = arith.maximumf %14, %15 : vector<64x128xf32>
    %17 = arith.truncf %16 : vector<64x128xf32> to vector<64x128xbf16>
    %c0_12 = arith.constant 0 : index
    %c0_13 = arith.constant 0 : index
    %18 = vector.load %arg6[%c0_12, %c0_13] : memref<64x128xbf16, #tpu.memory_space<vmem>>, vector<64x128xbf16>
    tpu.vector_store %arg6[%c0_12, %c0_13], %17 {strides = array<i32>} : memref<64x128xbf16, #tpu.memory_space<vmem>>, vector<64x128xbf16>,
    return
  }
  func.func @transform_0(%arg0: i32) -> (i32, i32) {
    %c0_i32 = arith.constant 0 : i32
    %c0_i32_0 = arith.constant 0 : i32
    return %arg0, %c0_i32 : i32, i32
  }
  func.func @transform_1(%arg0: i32) -> (i32, i32) {
    %c0_i32 = arith.constant 0 : i32
    %c0_i32_0 = arith.constant 0 : i32
    %c0_i32_1 = arith.constant 0 : i32
    return %c0_i32, %c0_i32_0 : i32, i32
  }
  func.func @transform_2(%arg0: i32) -> (i32, i32) {
    %c0_i32 = arith.constant 0 : i32
    %c0_i32_0 = arith.constant 0 : i32
    %c0_i32_1 = arith.constant 0 : i32
    return %c0_i32, %c0_i32_0 : i32, i32
  }
  func.func @transform_3(%arg0: i32) -> (i32, i32) {
    %c0_i32 = arith.constant 0 : i32
    %c0_i32_0 = arith.constant 0 : i32
    %c0_i32_1 = arith.constant 0 : i32
    return %c0_i32, %c0_i32_0 : i32, i32
  }
  func.func @transform_4(%arg0: i32) -> (i32, i32) {
    %c0_i32 = arith.constant 0 : i32
    %c0_i32_0 = arith.constant 0 : i32
    %c0_i32_1 = arith.constant 0 : i32
    return %c0_i32, %c0_i32_0 : i32, i32
  }
  func.func @transform_5(%arg0: i32) -> (i32, i32) {
    %c0_i32 = arith.constant 0 : i32
    %c0_i32_0 = arith.constant 0 : i32
    return %arg0, %c0_i32 : i32, i32
  }
}

</mosaic_0001>

<llo_original>
// kernel: tpu_custom_call.1
$region0: #{tpu_custom_call.1}
  #allocation0 [shape = 'u32[]', space=smem, size = 0x4, offset = 0x4, fixed_abs, tag = 'smem constant byte address 0x4 - core index']
  #allocation1 [shape = 'u32[72,128]{1,0:T(1,128)}', space=vmem, size = 0x9000, scoped, tag = 'internal scratch']
  %s0 = inlined_call_operand.hbm [shape: f32[200,215], index: 0, kind: input, shape index: {}]
  %s1 = inlined_call_operand.hbm [shape: bf16[215,128], index: 1, kind: input, shape index: {}]
  %s2 = inlined_call_operand.vmem [shape: f32[1,128], index: 2, kind: input, shape index: {}]
  %s3 = inlined_call_operand.hbm [shape: bf16[128,128], index: 3, kind: input, shape index: {}]
  %s4 = inlined_call_operand.vmem [shape: f32[1,128], index: 4, kind: input, shape index: {}]
  %s5 = inlined_call_operand.hbm [shape: bf16[200,128], index: 5, kind: output, shape index: {}]
  %s6 = sld [smem:[#allocation0]]
  $region65: #{tpu_custom_call.1} parent=0
    _
  %s8 = ssub.s32 1, %s6
  %s9 = scalar_select 0, %s8, %s6
  $region1: #{tpu_custom_call.1} parent=0
    #allocation2 [shape = 'u8[131072]{0}', space=vmem, size = 0x20000, scoped, tag = 'input window, operand 0']
    #allocation3 [shape = 's32[2]{0}', space=sflag, size = 0x8, scoped, tag = 'scoped memory for tpu_custom_call.1']
    #allocation4 [shape = 's32[2]{0}', space=sflag, size = 0x8, scoped, tag = 'scoped memory for tpu_custom_call.1']
    #allocation5 [shape = 'u8[55296]{0}', space=vmem, size = 0xd800, scoped, tag = 'input window, operand 1, single buffered']
    #allocation6 [shape = 's32[1]{0}', space=sflag, size = 0x4, scoped, tag = 'scoped memory for tpu_custom_call.1']
    #allocation7 [shape = 'u8[32768]{0}', space=vmem, size = 0x8000, scoped, tag = 'input window, operand 3, single buffered']
    #allocation8 [shape = 'u8[32768]{0}', space=vmem, size = 0x8000, scoped, tag = 'output window, operand 0']
    %10 = vsyncpa [#allocation3], 0
    %s11 = scalar_lea.sflag [#allocation3], 1
    %12 = vsyncpa %s11, 0
    %13 = vsyncpa [#allocation6], 0
    %14 = vsyncpa [#allocation4], 0
    %s15 = scalar_lea.sflag [#allocation4], 1
    %16 = vsyncpa %s15, 0
    loop: start=0, step=1, limit=6
    $region2: #{tpu_custom_call.1} parent=1 // loop_pre_header
      _
    $region3: #{tpu_custom_call.1} parent=1 // loop_header
      %s18 = sphi 0, %s22
      %p19 = scmp.ge.s32.totalorder %s18, 6
      %s28 = sphi 0, %s30
      %s31 = sphi 0, %s28
      %s32 = sphi 0, %s31
      %s48 = sphi 0, %s32
      %s52 = sphi 0, %s52
      %s54 = sphi 0, %s52
      %s55 = sphi 0, %s54
      %s69 = sphi 0, %s55
      %s73 = sphi 0, %s73
      %s75 = sphi 0, %s73
      %s76 = sphi 0, %s75
      %s90 = sphi 0, %s76
      %s94 = sphi 0, %s94
      %s96 = sphi 0, %s94
      %s97 = sphi 0, %s96
      %s111 = sphi 0, %s97
      %s115 = sphi 0, %s115
      %s117 = sphi 0, %s115
      %s118 = sphi 0, %s117
      %s132 = sphi 0, %s118
      %s138 = sphi 0, %s140
      %s141 = sphi 0, %s138
      %s142 = sphi 0, %s141
      %s158 = sphi 0, %s142
    $region4: #{tpu_custom_call.1} parent=1 // loop_header_branch
      %21 = sbr.rel (%p19) target = $region8
    $region5: #{tpu_custom_call.1} parent=1 // loop_body
      %s23 = ssub.s32 %s18, 1
      %s24 = ssub.s32 %s18, 2
      %s25 = sadd.s32 %s18, 1
      %s26 = ssub.s32 %s18, %s25
      %p27 = scmp.eq.s32.totalorder %s26, 0
      %s29 = sadd.s32 %s28, 1
      %s30 = scalar_select %p27, %s28, %s29
      %p33 = pneg %p27
      %p34 = scmp.eq.s32.totalorder %s18, 3
      %p35 = por %p33, %p34
      %p36 = scmp.ne.s32.totalorder %s28, %s31
      %p37 = scmp.eq.s32.totalorder %s18, 0
      %p38 = por %p36, %p37
      %p39 = scmp.ne.s32.totalorder %s28, %s31
      %p40 = scmp.eq.s32.totalorder %s23, 3
      %p41 = por %p39, %p40
      %p42 = scmp.ne.s32.totalorder %s31, %s32
      %p43 = scmp.eq.s32.totalorder %s23, 0
      %p44 = por %p42, %p43
      %p45 = scmp.ne.s32.totalorder %s31, %s32
      %p46 = scmp.eq.s32.totalorder %s24, 3
      %p47 = por %p45, %p46
      %p49 = scmp.ne.s32.totalorder %s32, %s48
      %p50 = scmp.eq.s32.totalorder %s24, 0
      %p51 = por %p49, %p50
      %s53 = sadd.s32 %s52, 1
      %p56 = scmp.eq.s32.totalorder %s18, 3
      %p57 = scmp.ne.s32.totalorder %s52, %s54
      %p58 = scmp.eq.s32.totalorder %s18, 0
      %p59 = por %p57, %p58
      %p60 = scmp.ne.s32.totalorder %s52, %s54
      %p61 = scmp.eq.s32.totalorder %s23, 3
      %p62 = por %p60, %p61
      %p63 = scmp.ne.s32.totalorder %s54, %s55
      %p64 = scmp.eq.s32.totalorder %s23, 0
      %p65 = por %p63, %p64
      %p66 = scmp.ne.s32.totalorder %s54, %s55
      %p67 = scmp.eq.s32.totalorder %s24, 3
      %p68 = por %p66, %p67
      %p70 = scmp.ne.s32.totalorder %s55, %s69
      %p71 = scmp.eq.s32.totalorder %s24, 0
      %p72 = por %p70, %p71
      %s74 = sadd.s32 %s73, 1
      %p77 = scmp.eq.s32.totalorder %s18, 3
      %p78 = scmp.ne.s32.totalorder %s73, %s75
      %p79 = scmp.eq.s32.totalorder %s18, 0
      %p80 = por %p78, %p79
      %p81 = scmp.ne.s32.totalorder %s73, %s75
      %p82 = scmp.eq.s32.totalorder %s23, 3
      %p83 = por %p81, %p82
      %p84 = scmp.ne.s32.totalorder %s75, %s76
      %p85 = scmp.eq.s32.totalorder %s23, 0
      %p86 = por %p84, %p85
      %p87 = scmp.ne.s32.totalorder %s75, %s76
      %p88 = scmp.eq.s32.totalorder %s24, 3
      %p89 = por %p87, %p88
      %p91 = scmp.ne.s32.totalorder %s76, %s90
      %p92 = scmp.eq.s32.totalorder %s24, 0
      %p93 = por %p91, %p92
      %s95 = sadd.s32 %s94, 1
      %p98 = scmp.eq.s32.totalorder %s18, 3
      %p99 = scmp.ne.s32.totalorder %s94, %s96
      %p100 = scmp.eq.s32.totalorder %s18, 0
      %p101 = por %p99, %p100
      %p102 = scmp.ne.s32.totalorder %s94, %s96
      %p103 = scmp.eq.s32.totalorder %s23, 3
      %p104 = por %p102, %p103
      %p105 = scmp.ne.s32.totalorder %s96, %s97
      %p106 = scmp.eq.s32.totalorder %s23, 0
      %p107 = por %p105, %p106
      %p108 = scmp.ne.s32.totalorder %s96, %s97
      %p109 = scmp.eq.s32.totalorder %s24, 3
      %p110 = por %p108, %p109
      %p112 = scmp.ne.s32.totalorder %s97, %s111
      %p113 = scmp.eq.s32.totalorder %s24, 0
      %p114 = por %p112, %p113
      %s116 = sadd.s32 %s115, 1
      %p119 = scmp.eq.s32.totalorder %s18, 3
      %p120 = scmp.ne.s32.totalorder %s115, %s117
      %p121 = scmp.eq.s32.totalorder %s18, 0
      %p122 = por %p120, %p121
      %p123 = scmp.ne.s32.totalorder %s115, %s117
      %p124 = scmp.eq.s32.totalorder %s23, 3
      %p125 = por %p123, %p124
      %p126 = scmp.ne.s32.totalorder %s117, %s118
      %p127 = scmp.eq.s32.totalorder %s23, 0
      %p128 = por %p126, %p127
      %p129 = scmp.ne.s32.totalorder %s117, %s118
      %p130 = scmp.eq.s32.totalorder %s24, 3
      %p131 = por %p129, %p130
      %p133 = scmp.ne.s32.totalorder %s118, %s132
      %p134 = scmp.eq.s32.totalorder %s24, 0
      %p135 = por %p133, %p134
      %s136 = ssub.s32 %s18, %s25
      %p137 = scmp.eq.s32.totalorder %s136, 0
      %s139 = sadd.s32 %s138, 1
      %s140 = scalar_select %p137, %s138, %s139
      %p143 = pneg %p137
      %p144 = scmp.eq.s32.totalorder %s18, 3
      %p145 = por %p143, %p144
      %p146 = scmp.ne.s32.totalorder %s138, %s141
      %p147 = scmp.eq.s32.totalorder %s18, 0
      %p148 = por %p146, %p147
      %p149 = scmp.ne.s32.totalorder %s138, %s141
      %p150 = scmp.eq.s32.totalorder %s23, 3
      %p151 = por %p149, %p150
      %p152 = scmp.ne.s32.totalorder %s141, %s142
      %p153 = scmp.eq.s32.totalorder %s23, 0
      %p154 = por %p152, %p153
      %p155 = scmp.ne.s32.totalorder %s141, %s142
      %p156 = scmp.eq.s32.totalorder %s24, 3
      %p157 = por %p155, %p156
      %p159 = scmp.ne.s32.totalorder %s142, %s158
      %p160 = scmp.eq.s32.totalorder %s24, 0
      %p161 = por %p159, %p160
      %p162 = scmp.le.s32.totalorder 1, %s18
      %p163 = scmp.lt.s32.totalorder %s18, 5
      %p164 = pnand %p162, %p163
      %p165 = pneg %p164
      // Predicated region
      $region9: #{tpu_custom_call.1} parent=5 // pred_check
        _
      $region10: #{tpu_custom_call.1} parent=5 // pred_check_branch
        %167 = sbr.rel (%p164) target = $region12
      $region11: #{tpu_custom_call.1} parent=5 // pred_region
        %s168 = ssub.s32 %s18, 1
        // Predicated region
        $region13: #{tpu_custom_call.1} parent=11 // pred_check
          %p169 = pneg %p65
        $region14: #{tpu_custom_call.1} parent=11 // pred_check_branch
          %171 = sbr.rel (%p169) target = $region16
        $region15: #{tpu_custom_call.1} parent=11 // pred_region
          %173 = vsyncadd [#allocation6], 0
          %s174 = sshll.u32 %s1, 4
          %s175 = int_to_ptr.hbm [resolvable:$true] %s174
          %s176 = sshll.u32 [#allocation5], 4
          %s177 = int_to_ptr.vmem [resolvable:$true] %s176
          %182 = dma.hbm_to_vmem [thread:$0]  %s175, 1728, %s177, [#allocation6], 64, 64, 4
        $region16: #{tpu_custom_call.1} parent=11 // pred_fallthru
          _
        // Predicated region
        $region17: #{tpu_custom_call.1} parent=11 // pred_check
          %p183 = pneg %p86
        $region18: #{tpu_custom_call.1} parent=11 // pred_check_branch
          %185 = sbr.rel (%p183) target = $region20
        $region19: #{tpu_custom_call.1} parent=11 // pred_region
          _
        $region20: #{tpu_custom_call.1} parent=11 // pred_fallthru
          _
        // Predicated region
        $region21: #{tpu_custom_call.1} parent=11 // pred_check
          %p186 = pneg %p107
        $region22: #{tpu_custom_call.1} parent=11 // pred_check_branch
          %188 = sbr.rel (%p186) target = $region24
        $region23: #{tpu_custom_call.1} parent=11 // pred_region
          %190 = vsyncadd [#allocation6], 0
          %s191 = sshll.u32 %s3, 4
          %s192 = int_to_ptr.hbm [resolvable:$true] %s191
          %s193 = sshll.u32 [#allocation7], 4
          %s194 = int_to_ptr.vmem [resolvable:$true] %s193
          %199 = dma.hbm_to_vmem [thread:$0]  %s192, 1024, %s194, [#allocation6], 64, 64, 4
        $region24: #{tpu_custom_call.1} parent=11 // pred_fallthru
          _
        // Predicated region
        $region25: #{tpu_custom_call.1} parent=11 // pred_check
          %p200 = pneg %p128
        $region26: #{tpu_custom_call.1} parent=11 // pred_check_branch
          %202 = sbr.rel (%p200) target = $region28
        $region27: #{tpu_custom_call.1} parent=11 // pred_region
          _
        $region28: #{tpu_custom_call.1} parent=11 // pred_fallthru
          _
      $region12: #{tpu_custom_call.1} parent=5 // pred_fallthru
        _
      %p203 = scmp.lt.s32.totalorder %s18, 4
      // Predicated region
      $region29: #{tpu_custom_call.1} parent=5 // pred_check
        %p204 = pneg %p203
      $region30: #{tpu_custom_call.1} parent=5 // pred_check_branch
        %206 = sbr.rel (%p204) target = $region32
      $region31: #{tpu_custom_call.1} parent=5 // pred_region
        // Predicated region
        $region33: #{tpu_custom_call.1} parent=31 // pred_check
          %p207 = pneg %p38
        $region34: #{tpu_custom_call.1} parent=31 // pred_check_branch
          %209 = sbr.rel (%p207) target = $region36
        $region35: #{tpu_custom_call.1} parent=31 // pred_region
          %s210 = sand.u32 %s28, 1
          %s211 = scalar_lea.sflag [#allocation3], %s210
          %s212 = sand.u32 %s28, 1
          %s213 = smul.addr %s212, 128
          %s214 = scalar_lea.vmem [#allocation2], %s213
          %s215 = smul.u32 8, %s18
          %s216 = ssub.s32 25, %s215
          %p217 = scmp.lt.s32.totalorder %s216, 8
          %s218 = scalar_select %p217, %s216, 8
          %s219 = smul.u32 8, %s218
          %s220 = smul.u32 %s219, 2
          %s221 = ssub.s32 128, %s220
          %s222 = sshll.u32 %s221, 4
          %223 = vsyncadd %s211, %s222
          %p224 = scmp.ne.s32.totalorder 0, %s220
          %s225 = smul.addr %s215, 2
          %s226 = smul.addr %s225, 8
          %s227 = scalar_lea.hbm %s0, %s226
          %s228 = smul.u32 16, %s218
          %s229 = sshll.u32 %s227, 4
          %s230 = int_to_ptr.hbm [resolvable:$true] %s229
          %s231 = sshll.u32 %s214, 4
          %s232 = int_to_ptr.vmem [resolvable:$true] %s231
          %s233 = sshll.u32 %s228, 4
          %237 = dma.hbm_to_vmem [thread:$0]  (%p224), %s230, %s233, %s232, %s211, 256, 256, 16
        $region36: #{tpu_custom_call.1} parent=31 // pred_fallthru
          _
      $region32: #{tpu_custom_call.1} parent=5 // pred_fallthru
        _
      %p238 = scmp.le.s32.totalorder 1, %s18
      %p239 = scmp.lt.s32.totalorder %s18, 5
      %p240 = pnand %p238, %p239
      %p241 = pneg %p240
      // Predicated region
      $region37: #{tpu_custom_call.1} parent=5 // pred_check
        _
      $region38: #{tpu_custom_call.1} parent=5 // pred_check_branch
        %243 = sbr.rel (%p240) target = $region40
      $region39: #{tpu_custom_call.1} parent=5 // pred_region
        %s244 = ssub.s32 %s18, 1
        %s245 = sand.u32 %s31, 1
        %s246 = scalar_lea.sflag [#allocation3], %s245
        %s247 = sand.u32 %s31, 1
        %s248 = smul.addr %s247, 128
        %s249 = scalar_lea.vmem [#allocation2], %s248
        // Predicated region
        $region41: #{tpu_custom_call.1} parent=39 // pred_check
          %p250 = pneg %p44
        $region42: #{tpu_custom_call.1} parent=39 // pred_check_branch
          %252 = sbr.rel (%p250) target = $region44
        $region43: #{tpu_custom_call.1} parent=39 // pred_region
          %254 = dma.done %s246, 2048
        $region44: #{tpu_custom_call.1} parent=39 // pred_fallthru
          _
        // Predicated region
        $region45: #{tpu_custom_call.1} parent=39 // pred_check
          %p255 = pneg %p65
        $region46: #{tpu_custom_call.1} parent=39 // pred_check_branch
          %257 = sbr.rel (%p255) target = $region48
        $region47: #{tpu_custom_call.1} parent=39 // pred_region
          %259 = dma.done [#allocation6], 1728
        $region48: #{tpu_custom_call.1} parent=39 // pred_fallthru
          _
        // Predicated region
        $region49: #{tpu_custom_call.1} parent=39 // pred_check
          %p260 = pneg %p107
        $region50: #{tpu_custom_call.1} parent=39 // pred_check_branch
          %262 = sbr.rel (%p260) target = $region52
        $region51: #{tpu_custom_call.1} parent=39 // pred_region
          %264 = dma.done [#allocation6], 1024
        $region52: #{tpu_custom_call.1} parent=39 // pred_fallthru
          _
        %s265 = sand.u32 %s31, 1
        %s266 = scalar_lea.sflag [#allocation3], %s265
        %s267 = sand.u32 %s31, 1
        %s268 = smul.addr %s267, 128
        %s269 = scalar_lea.vmem [#allocation2], %s268
        %p270 = pneg %p44
        %p271 = pneg %p41
        %p272 = pneg %p65
        %p273 = pneg %p62
        %p274 = pneg %p86
        %p275 = pneg %p83
        %p276 = pneg %p107
        %p277 = pneg %p104
        %p278 = pneg %p128
        %p279 = pneg %p125
        %p280 = pneg %p154
        %p281 = pneg %p151
        %s282 = sand.u32 %s141, 1
        %s283 = scalar_lea.sflag [#allocation4], %s282
        %s284 = sand.u32 %s141, 1
        %s285 = smul.addr %s284, 32
        %s286 = scalar_lea.vmem [#allocation8], %s285
        %s287 = smul.u32 8, %s23
        %s288 = ssub.s32 25, %s287
        %p289 = scmp.lt.s32.totalorder %s288, 8
        %s290 = scalar_select %p289, %s288, 8
        %s291 = smul.u32 8, %s290
        %s292 = smul.u32 %s291, 2
        %s293 = smul.u32 8, %s23
        %s294 = ssub.s32 25, %s293
        %p295 = scmp.lt.s32.totalorder %s294, 8
        %s296 = scalar_select %p295, %s294, 8
        %s297 = smul.u32 4, %s296
        %v299 = vld [vmem:[%s249] sm:$0xff]
        %v300 = vld [vmem:[%s249 + $0x8] sm:$0xff]
        %v301 = vld [vmem:[%s249 + $0x10] sm:$0xff]
        %v302 = vld [vmem:[%s249 + $0x18] sm:$0xff]
        %v303 = vld [vmem:[%s249 + $0x20] sm:$0xff]
        %v304 = vld [vmem:[%s249 + $0x28] sm:$0xff]
        %v305 = vld [vmem:[%s249 + $0x30] sm:$0xff]
        %v306 = vld [vmem:[%s249 + $0x38] sm:$0xff]
        %v307 = vld [vmem:[%s249 + $0x40] sm:$0xff]
        %v308 = vld [vmem:[%s249 + $0x48] sm:$0xff]
        %v309 = vld [vmem:[%s249 + $0x50] sm:$0xff]
        %v310 = vld [vmem:[%s249 + $0x58] sm:$0xff]
        %v311 = vld [vmem:[%s249 + $0x60] sm:$0xff]
        %v312 = vld [vmem:[%s249 + $0x68] sm:$0xff]
        %v313 = vld [vmem:[%s249 + $0x70] sm:$0xff]
        %v314 = vld [vmem:[%s249 + $0x78] sm:$0xff]
        %v315 = vpack.c.bf16 %v301, %v299
        %v316 = vpack.c.bf16 %v302, %v300
        %v317 = vpack.c.bf16 %v305, %v303
        %v318 = vpack.c.bf16 %v306, %v304
        %v319 = vpack.c.bf16 %v309, %v307
        %v320 = vpack.c.bf16 %v310, %v308
        %v321 = vpack.c.bf16 %v313, %v311
        %v322 = vpack.c.bf16 %v314, %v312
        %v323 = vld [vmem:[#allocation5] sm:$0xf]
        %v324 = vld [vmem:[#allocation5 + $0x4] sm:$0xf]
        %v325 = vld [vmem:[#allocation5 + $0x8] sm:$0xf]
        %v326 = vld [vmem:[#allocation5 + $0xc] sm:$0xf]
        %v327 = vld [vmem:[#allocation5 + $0x10] sm:$0xf]
        %v328 = vld [vmem:[#allocation5 + $0x14] sm:$0xf]
        %v329 = vld [vmem:[#allocation5 + $0x18] sm:$0xf]
        %v330 = vld [vmem:[#allocation5 + $0x1c] sm:$0xf]
        %v331 = vld [vmem:[#allocation5 + $0x20] sm:$0xf]
        %v332 = vld [vmem:[#allocation5 + $0x24] sm:$0xf]
        %v333 = vld [vmem:[#allocation5 + $0x28] sm:$0xf]
        %v334 = vld [vmem:[#allocation5 + $0x2c] sm:$0xf]
        %v335 = vld [vmem:[#allocation5 + $0x30] sm:$0xf]
        %v336 = vld [vmem:[#allocation5 + $0x34] sm:$0xf]
        %v337 = vld [vmem:[#allocation5 + $0x38] sm:$0xf]
        %v338 = vld [vmem:[#allocation5 + $0x3c] sm:$0xf]
        %v339 = vld [vmem:[#allocation5 + $0x40] sm:$0xf]
        %v340 = vld [vmem:[#allocation5 + $0x44] sm:$0xf]
        %v341 = vld [vmem:[#allocation5 + $0x48] sm:$0xf]
        %v342 = vld [vmem:[#allocation5 + $0x4c] sm:$0xf]
        %v343 = vld [vmem:[#allocation5 + $0x50] sm:$0xf]
        %v344 = vld [vmem:[#allocation5 + $0x54] sm:$0xf]
        %v345 = vld [vmem:[#allocation5 + $0x58] sm:$0xf]
        %v346 = vld [vmem:[#allocation5 + $0x5c] sm:$0xf]
        %v347 = vld [vmem:[#allocation5 + $0x60] sm:$0xf]
        %v348 = vld [vmem:[#allocation5 + $0x64] sm:$0xf]
        %v349 = vld [vmem:[#allocation5 + $0x68] sm:$0xf]
        %v350 = vld [vmem:[%s2] sm:$0x1]
        %v352 = vperm.slane %v350, 0
        %v381 = vunpack.c.l.b16 %v323
        %v382 = vunpack.c.l.b16 %v324
        %v383 = vunpack.c.l.b16 %v325
        %v384 = vunpack.c.l.b16 %v326
        %v385 = vunpack.c.l.b16 %v327
        %v386 = vunpack.c.l.b16 %v328
        %v387 = vunpack.c.l.b16 %v329
        %v388 = vunpack.c.l.b16 %v330
        %v389 = vunpack.c.l.b16 %v331
        %v390 = vunpack.c.l.b16 %v332
        %v391 = vunpack.c.l.b16 %v333
        %v392 = vunpack.c.l.b16 %v334
        %v393 = vunpack.c.l.b16 %v335
        %v394 = vunpack.c.l.b16 %v336
        %v395 = vunpack.c.l.b16 %v337
        %v396 = vunpack.c.l.b16 %v338
        %v397 = vunpack.c.l.b16 %v339
        %v398 = vunpack.c.l.b16 %v340
        %v399 = vunpack.c.l.b16 %v341
        %v400 = vunpack.c.l.b16 %v342
        %v401 = vunpack.c.l.b16 %v343
        %v402 = vunpack.c.l.b16 %v344
        %v403 = vunpack.c.l.b16 %v345
        %v404 = vunpack.c.l.b16 %v346
        %v405 = vunpack.c.l.b16 %v347
        %v406 = vunpack.c.l.b16 %v348
        %v407 = vunpack.c.l.b16 %v349
        %v408 = vpack.c.b16 %v382, %v381
        %v409 = vpack.c.b16 %v384, %v383
        %v410 = vpack.c.b16 %v386, %v385
        %v411 = vpack.c.b16 %v388, %v387
        %v412 = vpack.c.b16 %v390, %v389
        %v413 = vpack.c.b16 %v392, %v391
        %v414 = vpack.c.b16 %v394, %v393
        %v415 = vpack.c.b16 %v396, %v395
        %v416 = vpack.c.b16 %v398, %v397
        %v417 = vpack.c.b16 %v400, %v399
        %v418 = vpack.c.b16 %v402, %v401
        %v419 = vpack.c.b16 %v404, %v403
        %v420 = vpack.c.b16 %v406, %v405
        %v421 = vpack.c.b16 %v407, %v407
        %vm435 = vcmask 711680
        %v437 = vsel %vm435, %v316, 0
        %v440 = vsel %vm435, %v318, 0
        %v443 = vsel %vm435, %v320, 0
        %v446 = vsel %vm435, %v322, 0
        %vm448 = vcmask 1042432
        %vm449 = vcmask 1043456
        %v450 = vsel %vm448, 4294967295, 65535
        %v451 = vsel %vm449, %v450, 0
        %v453 = vand.u32 %v421, %v451
        %455 = vmatpush.bf16.msra.mxu0 %v415
        %456 = vmatpush.bf16.msra.mxu0 %v414
        %457 = vmatpush.bf16.msra.mxu0 %v413
        %458 = vmatpush.bf16.msra.mxu0 %v412
        %459 = vmatpush.bf16.msra.mxu0 %v411
        %460 = vmatpush.bf16.msra.mxu0 %v410
        %461 = vmatpush.bf16.msra.mxu0 %v409
        %462 = vmatpush.bf16.msra.mxu0 %v408
        %463 = vmatmul.bf16.gmra.mxu0 %v315
        %v464 = vpop.f32.mrf.mxu0
        %v465 = vadd.f32 %v352, %v464
        %v466 = vpop.f32.mrf.mxu0
        %v467 = vadd.f32 %v352, %v466
        %468 = vmatmul.bf16.gmra.mxu0 %v317
        %v469 = vpop.f32.mrf.mxu0
        %v470 = vadd.f32 %v352, %v469
        %v471 = vpop.f32.mrf.mxu0
        %v472 = vadd.f32 %v352, %v471
        %473 = vmatmul.bf16.gmra.mxu0 %v319
        %v474 = vpop.f32.mrf.mxu0
        %v475 = vadd.f32 %v352, %v474
        %v476 = vpop.f32.mrf.mxu0
        %v477 = vadd.f32 %v352, %v476
        %478 = vmatmul.bf16.gmra.mxu0 %v321
        %v479 = vpop.f32.mrf.mxu0
        %v480 = vadd.f32 %v352, %v479
        %v481 = vpop.f32.mrf.mxu0
        %v482 = vadd.f32 %v352, %v481
        %483 = vdwg.mxu0
        %484 = vmatpush.bf16.msra.mxu0 0
        %485 = vmatpush.bf16.msra.mxu0 0
        %486 = vmatpush.bf16.msra.mxu0 %v453
        %487 = vmatpush.bf16.msra.mxu0 %v420
        %488 = vmatpush.bf16.msra.mxu0 %v419
        %489 = vmatpush.bf16.msra.mxu0 %v418
        %490 = vmatpush.bf16.msra.mxu0 %v417
        %491 = vmatpush.bf16.msra.mxu0 %v416
        %492 = vmatmul.bf16.gmra.mxu0 %v437
        %v493 = vpop.f32.mrf.mxu0
        %v494 = vadd.f32 %v465, %v493
        %v495 = vpop.f32.mrf.mxu0
        %v496 = vadd.f32 %v467, %v495
        %497 = vmatmul.bf16.gmra.mxu0 %v440
        %v498 = vpop.f32.mrf.mxu0
        %v499 = vadd.f32 %v470, %v498
        %v500 = vpop.f32.mrf.mxu0
        %v501 = vadd.f32 %v472, %v500
        %502 = vmatmul.bf16.gmra.mxu0 %v443
        %v503 = vpop.f32.mrf.mxu0
        %v504 = vadd.f32 %v475, %v503
        %v505 = vpop.f32.mrf.mxu0
        %v506 = vadd.f32 %v477, %v505
        %507 = vmatmul.bf16.gmra.mxu0 %v446
        %v508 = vpop.f32.mrf.mxu0
        %v509 = vadd.f32 %v480, %v508
        %v510 = vpop.f32.mrf.mxu0
        %v511 = vadd.f32 %v482, %v510
        %512 = vdwg.mxu0
        %v513 = vmax.f32 %v494, 0.0
        %v514 = vmax.f32 %v496, 0.0
        %v515 = vmax.f32 %v499, 0.0
        %v516 = vmax.f32 %v501, 0.0
        %v517 = vmax.f32 %v504, 0.0
        %v518 = vmax.f32 %v506, 0.0
        %v519 = vmax.f32 %v509, 0.0
        %v520 = vmax.f32 %v511, 0.0
        %v521 = vpack.c.bf16 %v514, %v513
        %v522 = vpack.c.bf16 %v516, %v515
        %v523 = vpack.c.bf16 %v518, %v517
        %v524 = vpack.c.bf16 %v520, %v519
        %v525 = vld [vmem:[#allocation7] sm:$0xf]
        %v526 = vld [vmem:[#allocation7 + $0x4] sm:$0xf]
        %v527 = vld [vmem:[#allocation7 + $0x8] sm:$0xf]
        %v528 = vld [vmem:[#allocation7 + $0xc] sm:$0xf]
        %v529 = vld [vmem:[#allocation7 + $0x10] sm:$0xf]
        %v530 = vld [vmem:[#allocation7 + $0x14] sm:$0xf]
        %v531 = vld [vmem:[#allocation7 + $0x18] sm:$0xf]
        %v532 = vld [vmem:[#allocation7 + $0x1c] sm:$0xf]
        %v533 = vld [vmem:[#allocation7 + $0x20] sm:$0xf]
        %v534 = vld [vmem:[#allocation7 + $0x24] sm:$0xf]
        %v535 = vld [vmem:[#allocation7 + $0x28] sm:$0xf]
        %v536 = vld [vmem:[#allocation7 + $0x2c] sm:$0xf]
        %v537 = vld [vmem:[#allocation7 + $0x30] sm:$0xf]
        %v538 = vld [vmem:[#allocation7 + $0x34] sm:$0xf]
        %v539 = vld [vmem:[#allocation7 + $0x38] sm:$0xf]
        %v540 = vld [vmem:[#allocation7 + $0x3c] sm:$0xf]
        %v541 = vld [vmem:[%s4] sm:$0x1]
        %v543 = vperm.slane %v541, 0
        %v561 = vunpack.c.l.b16 %v525
        %v562 = vunpack.c.l.b16 %v526
        %v563 = vunpack.c.l.b16 %v527
        %v564 = vunpack.c.l.b16 %v528
        %v565 = vunpack.c.l.b16 %v529
        %v566 = vunpack.c.l.b16 %v530
        %v567 = vunpack.c.l.b16 %v531
        %v568 = vunpack.c.l.b16 %v532
        %v569 = vunpack.c.l.b16 %v533
        %v570 = vunpack.c.l.b16 %v534
        %v571 = vunpack.c.l.b16 %v535
        %v572 = vunpack.c.l.b16 %v536
        %v573 = vunpack.c.l.b16 %v537
        %v574 = vunpack.c.l.b16 %v538
        %v575 = vunpack.c.l.b16 %v539
        %v576 = vunpack.c.l.b16 %v540
        %v577 = vpack.c.b16 %v562, %v561
        %v578 = vpack.c.b16 %v564, %v563
        %v579 = vpack.c.b16 %v566, %v565
        %v580 = vpack.c.b16 %v568, %v567
        %v581 = vpack.c.b16 %v570, %v569
        %v582 = vpack.c.b16 %v572, %v571
        %v583 = vpack.c.b16 %v574, %v573
        %v584 = vpack.c.b16 %v576, %v575
        %593 = vmatpush.bf16.msra.mxu0 %v584
        %594 = vmatpush.bf16.msra.mxu0 %v583
        %595 = vmatpush.bf16.msra.mxu0 %v582
        %596 = vmatpush.bf16.msra.mxu0 %v581
        %597 = vmatpush.bf16.msra.mxu0 %v580
        %598 = vmatpush.bf16.msra.mxu0 %v579
        %599 = vmatpush.bf16.msra.mxu0 %v578
        %600 = vmatpush.bf16.msra.mxu0 %v577
        %601 = vmatmul.bf16.gmra.mxu0 %v521
        %v602 = vpop.f32.mrf.mxu0
        %v603 = vadd.f32 %v543, %v602
        %v604 = vpop.f32.mrf.mxu0
        %v605 = vadd.f32 %v543, %v604
        %606 = vmatmul.bf16.gmra.mxu0 %v522
        %v607 = vpop.f32.mrf.mxu0
        %v608 = vadd.f32 %v543, %v607
        %v609 = vpop.f32.mrf.mxu0
        %v610 = vadd.f32 %v543, %v609
        %611 = vmatmul.bf16.gmra.mxu0 %v523
        %v612 = vpop.f32.mrf.mxu0
        %v613 = vadd.f32 %v543, %v612
        %v614 = vpop.f32.mrf.mxu0
        %v615 = vadd.f32 %v543, %v614
        %616 = vmatmul.bf16.gmra.mxu0 %v524
        %v617 = vpop.f32.mrf.mxu0
        %v618 = vadd.f32 %v543, %v617
        %v619 = vpop.f32.mrf.mxu0
        %v620 = vadd.f32 %v543, %v619
        %621 = vdwg.mxu0
        %v622 = vmax.f32 %v603, 0.0
        %v623 = vmax.f32 %v605, 0.0
        %v624 = vmax.f32 %v608, 0.0
        %v625 = vmax.f32 %v610, 0.0
        %v626 = vmax.f32 %v613, 0.0
        %v627 = vmax.f32 %v615, 0.0
        %v628 = vmax.f32 %v618, 0.0
        %v629 = vmax.f32 %v620, 0.0
        %v630 = vpack.c.bf16 %v622, %v622
        %v631 = vpack.c.bf16 %v623, %v623
        %v632 = vpack.c.bf16 %v624, %v624
        %v633 = vpack.c.bf16 %v625, %v625
        %v634 = vpack.c.bf16 %v626, %v626
        %v635 = vpack.c.bf16 %v627, %v627
        %v636 = vpack.c.bf16 %v628, %v628
        %v637 = vpack.c.bf16 %v629, %v629
        %638 = vst [vmem:[%s286] sm:$0xf] %v630
        %639 = vst [vmem:[%s286 + $0x4] sm:$0xf] %v631
        %640 = vst [vmem:[%s286 + $0x8] sm:$0xf] %v632
        %641 = vst [vmem:[%s286 + $0xc] sm:$0xf] %v633
        %642 = vst [vmem:[%s286 + $0x10] sm:$0xf] %v634
        %643 = vst [vmem:[%s286 + $0x14] sm:$0xf] %v635
        %644 = vst [vmem:[%s286 + $0x18] sm:$0xf] %v636
        %645 = vst [vmem:[%s286 + $0x1c] sm:$0xf] %v637
        %s646 = sand.u32 %s141, 1
        %s647 = scalar_lea.sflag [#allocation4], %s646
        %s648 = sand.u32 %s141, 1
        %s649 = smul.addr %s648, 32
        %s650 = scalar_lea.vmem [#allocation8], %s649
        // Predicated region
        $region53: #{tpu_custom_call.1} parent=39 // pred_check
          %p651 = pneg %p151
        $region54: #{tpu_custom_call.1} parent=39 // pred_check_branch
          %653 = sbr.rel (%p651) target = $region56
        $region55: #{tpu_custom_call.1} parent=39 // pred_region
          %s654 = smul.u32 8, %s23
          %s655 = ssub.s32 25, %s654
          %p656 = scmp.lt.s32.totalorder %s655, 8
          %s657 = scalar_select %p656, %s655, 8
          %s658 = smul.u32 4, %s657
          %s659 = ssub.s32 32, %s658
          %s660 = sshll.u32 %s659, 4
          %661 = vsyncadd %s647, %s660
          %p662 = scmp.ne.s32.totalorder 0, %s658
          %s663 = smul.addr %s654, 4
          %s664 = scalar_lea.hbm %s5, %s663
          %s665 = smul.u32 4, %s657
          %s666 = sshll.u32 %s650, 4
          %s667 = int_to_ptr.vmem [resolvable:$true] %s666
          %s668 = sshll.u32 %s664, 4
          %s669 = int_to_ptr.hbm [resolvable:$true] %s668
          %s670 = sshll.u32 %s665, 4
          %674 = dma.vmem_to_hbm [thread:$0]  (%p662), %s667, %s670, %s669, %s647, 64, 64, 4
        $region56: #{tpu_custom_call.1} parent=39 // pred_fallthru
          _
      $region40: #{tpu_custom_call.1} parent=5 // pred_fallthru
        _
      %p675 = scmp.le.s32.totalorder 2, %s18
      // Predicated region
      $region57: #{tpu_custom_call.1} parent=5 // pred_check
        %p676 = pneg %p675
      $region58: #{tpu_custom_call.1} parent=5 // pred_check_branch
        %678 = sbr.rel (%p676) target = $region60
      $region59: #{tpu_custom_call.1} parent=5 // pred_region
        %s679 = ssub.s32 %s18, 2
        // Predicated region
        $region61: #{tpu_custom_call.1} parent=59 // pred_check
          %p680 = pneg %p157
        $region62: #{tpu_custom_call.1} parent=59 // pred_check_branch
          %682 = sbr.rel (%p680) target = $region64
        $region63: #{tpu_custom_call.1} parent=59 // pred_region
          %s683 = sand.u32 %s142, 1
          %s684 = scalar_lea.sflag [#allocation4], %s683
          %s685 = sand.u32 %s142, 1
          %s686 = smul.addr %s685, 32
          %s687 = scalar_lea.vmem [#allocation8], %s686
          %689 = dma.done %s684, 512
        $region64: #{tpu_custom_call.1} parent=59 // pred_fallthru
          _
      $region60: #{tpu_custom_call.1} parent=5 // pred_fallthru
        _
    $region6: #{tpu_custom_call.1} parent=1 // loop_footer
      %s22 = sadd.s32 1, %s18
    $region7: #{tpu_custom_call.1} parent=1 // loop_footer_branch
      %17 = sbr.rel target = $region3
    $region8: #{tpu_custom_call.1} parent=1 // loop_exit
      _
    %690 = vsyncpa [#allocation3], 1
    %s691 = scalar_lea.sflag [#allocation3], 1
    %692 = vsyncpa %s691, 1
    %693 = vsyncpa [#allocation6], 1
    %694 = vsyncpa [#allocation4], 1
    %s695 = scalar_lea.sflag [#allocation4], 1
    %696 = vsyncpa %s695, 1

</llo_original>
